<compile_context>
chip_gen: v7x
topology: tpu7x:2x2x1
jax: 0.10.0
libtpu: 0.0.40
codegen_flags: <defaults>
</compile_context>

<pallas_src>
import jax
import jax.numpy as jnp
from jax.experimental import pallas as pl
from jax.experimental.pallas import tpu as pltpu

_LANE = 128
_SMALL_BYPASS_BYTES = 1 << 20  # below ~1 MiB the launch overhead dwarfs the copy


def _copy_kernel(disp_ref, out_ref):
    # Whole-tile copy; with input/output aliasing this is effectively a
    # no-op write of identical data back to the same HBM buffer.
    out_ref[...] = disp_ref[...]


def _target_tile_bytes() -> int:
    """Generation-aware per-tile-buffer byte budget (4 live buffers total)."""
    try:
        kind = jax.devices()[0].device_kind.lower()
    except Exception:  # pragma: no cover - defensive; fall back to safest size
        kind = ""
    if "v5" in kind:          # v5e: 16 MiB default scoped VMEM -> 2 MiB tiles
        return 2 * 1024 * 1024
    return 4 * 1024 * 1024    # v6e / v7x: 32 MiB default scoped VMEM


def _choose_layout(total_elems: int, itemsize: int):
    """Lane-dense 2-D view (rows, 128) + dtype-aware row-tile size."""
    # Sub-32-bit dtypes pack along sublanes: require 8*(4/itemsize)-row tiles.
    sub_mult = 8 * max(1, 4 // max(itemsize, 1))
    pad = (-total_elems) % _LANE
    rows = (total_elems + pad) // _LANE

    row_bytes = _LANE * itemsize
    bh = (_target_tile_bytes() // row_bytes) // sub_mult * sub_mult
    bh = max(sub_mult, bh)
    if bh >= rows:
        bh = rows  # single full block; satisfies the "equals full dim" rule
    return rows, bh, pad


def fixed_depth_est_forward(disparity: jax.Array) -> jax.Array:
    """FixedDepthEst.forward(): the identity on the parameter.

    This is the recommended production path: it performs no HBM traffic and
    no kernel launch.  Use `fixed_depth_est_forward_pallas` only for
    API-parity testing of the Pallas copy kernel.
    """
    return disparity


def fixed_depth_est_forward_pallas(disparity: jax.Array,
                                   *,
                                   force_kernel: bool = True) -> jax.Array:
    """API-parity path: materializes forward() through a Pallas copy kernel.

    NOTE: input_output_aliases={0: 0} only eliminates the second HBM buffer
    when the (reshaped) input can be donated under jit; otherwise XLA inserts
    a defensive copy (~3x array size of traffic instead of ~2x).
    """
    n, c, h, w = disparity.shape
    total = n * c * h * w
    nbytes = total * disparity.dtype.itemsize

    # Small-shape bypass: paying pallas_call overhead to move <1 MiB is waste.
    if not force_kernel and nbytes < _SMALL_BYPASS_BYTES:
        return disparity

    rows, bh, pad = _choose_layout(total, disparity.dtype.itemsize)

    flat = disparity.reshape(total)
    if pad:
        # Pad to a lane-dense multiple of 128 so stores stay unmasked `vst`;
        # the pad is sliced off on return.
        flat = jnp.pad(flat, (0, pad))
    x2d = flat.reshape(rows, _LANE)  # free layout plumbing in the wrapper

    out2d = pl.pallas_call(
        _copy_kernel,
        out_shape=jax.ShapeDtypeStruct((rows, _LANE), disparity.dtype),
        grid=(pl.cdiv(rows, bh),),
        in_specs=[pl.BlockSpec((bh, _LANE), lambda i: (i, 0))],
        out_specs=pl.BlockSpec((bh, _LANE), lambda i: (i, 0)),
        input_output_aliases={0: 0},
        compiler_params=pltpu.CompilerParams(
            dimension_semantics=("parallel",)),
    )(x2d)

    out_flat = out2d.reshape(rows * _LANE)
    if pad:
        out_flat = out_flat[:total]
    return out_flat.reshape(n, c, h, w)


def init_fixed_depth_est_params(height_width, dtype=jnp.float32):
    """Matches the PyTorch __init__: disparity = ones((1, 1, h, w))."""
    h, w = height_width
    return jnp.ones((1, 1, h, w), dtype=dtype)


if __name__ == "__main__":
    # Small shape consistent with the module: H = W = 16.
    height_width = (16, 16)

    # Parameter init is deterministic (all ones); key shown only to document
    # deterministic example construction.
    _ = jax.random.PRNGKey(0)
    disparity = init_fixed_depth_est_params(height_width)

    # Hot path: identity (recommended).
    out_fast = fixed_depth_est_forward(disparity)
    out_fast = jax.block_until_ready(out_fast)
    assert out_fast.shape == (1, 1, 16, 16)
    assert bool(jnp.all(out_fast == disparity))

    # Parity path: run the Pallas copy kernel once (256 elems -> (2,128)).
    out_kernel = fixed_depth_est_forward_pallas(disparity, force_kernel=True)
    out_kernel = jax.block_until_ready(out_kernel)
    assert out_kernel.shape == (1, 1, 16, 16)
    assert out_kernel.dtype == jnp.float32
    assert bool(jnp.all(out_kernel == disparity))
    assert bool(jnp.all(out_kernel == 1.0))

    # Exercise the non-multiple-of-128 padded path as well (35 elements).
    odd = jnp.arange(35, dtype=jnp.float32).reshape(1, 1, 5, 7)
    out_odd = fixed_depth_est_forward_pallas(odd, force_kernel=True)
    out_odd = jax.block_until_ready(out_odd)
    assert out_odd.shape == (1, 1, 5, 7)
    assert bool(jnp.all(out_odd == odd))

    print("KERNEL_OK")
</pallas_src>

<mosaic_0001>
module attributes {stable_mosaic.version = 11 : i64} {
  func.func @_copy_kernel(%arg0: i32, %arg1: memref<2x128xf32, #tpu.memory_space<vmem>>, %arg2: memref<2x128xf32, #tpu.memory_space<vmem>>) attributes {dimension_semantics = [#tpu.dimension_semantics<parallel>], iteration_bounds = array<i64: 1>, scalar_prefetch = 0 : i64, scratch_operands = 0 : i64, tpu.core_type = #tpu.core_type<tc>, window_params = [{transform_indices = @transform_0, window_bounds = array<i64: 2, 128>}, {transform_indices = @transform_1, window_bounds = array<i64: 2, 128>}]} {
    %c0 = arith.constant 0 : index
    %c0_0 = arith.constant 0 : index
    %0 = vector.load %arg1[%c0, %c0_0] : memref<2x128xf32, #tpu.memory_space<vmem>>, vector<2x128xf32>
    %c0_1 = arith.constant 0 : index
    %c0_2 = arith.constant 0 : index
    %1 = vector.load %arg2[%c0_1, %c0_2] : memref<2x128xf32, #tpu.memory_space<vmem>>, vector<2x128xf32>
    tpu.vector_store %arg2[%c0_1, %c0_2], %0 {strides = array<i32>} : memref<2x128xf32, #tpu.memory_space<vmem>>, vector<2x128xf32>,
    return
  }
  func.func @transform_0(%arg0: i32) -> (i32, i32) {
    %c0_i32 = arith.constant 0 : i32
    %c0_i32_0 = arith.constant 0 : i32
    return %arg0, %c0_i32 : i32, i32
  }
  func.func @transform_1(%arg0: i32) -> (i32, i32) {
    %c0_i32 = arith.constant 0 : i32
    %c0_i32_0 = arith.constant 0 : i32
    return %arg0, %c0_i32 : i32, i32
  }
}

</mosaic_0001>

<llo_original>
// kernel: tpu_custom_call.1
$region0: #{tpu_custom_call.1}
  #allocation0 [shape = 'u32[]', space=smem, size = 0x4, offset = 0x4, fixed_abs, tag = 'smem constant byte address 0x4 - core index']
  #allocation1 [shape = 'u32[144,128]{1,0:T(1,128)}', space=vmem, size = 0x12000, scoped, tag = 'internal scratch']
  %s0 = inlined_call_operand.hbm [shape: f32[2,128], index: 0, kind: input, shape index: {}, may-alias: {0,1}]
  %s1 = inlined_call_operand.hbm [shape: f32[2,128], index: 1, kind: output, shape index: {}, may-alias: {0,1}]
  %s2 = sld [smem:[#allocation0]]
  $region18: #{tpu_custom_call.1} parent=0
    _
  %s4 = ssub.s32 1, %s2
  %s5 = scalar_select 0, %s4, %s2
  $region1: #{tpu_custom_call.1} parent=0
    #allocation2 [shape = 'u8[1024]{0}', space=vmem, size = 0x400, scoped, tag = 'input window, operand 0, single buffered']
    #allocation3 [shape = 's32[1]{0}', space=sflag, size = 0x4, scoped, tag = 'scoped memory for tpu_custom_call.1']
    #allocation4 [shape = 's32[1]{0}', space=sflag, size = 0x4, scoped, tag = 'scoped memory for tpu_custom_call.1']
    #allocation5 [shape = 'u8[1024]{0}', space=vmem, size = 0x400, scoped, tag = 'output window, operand 0, single buffered']
    %6 = vsyncpa [#allocation3], 0
    %7 = vsyncpa [#allocation4], 0
    // Predicated region
    $region2: #{tpu_custom_call.1} parent=1 // pred_check
      _
    $region3: #{tpu_custom_call.1} parent=1 // pred_check_branch
      %9 = sbr.rel (0) target = $region5
    $region4: #{tpu_custom_call.1} parent=1 // pred_region
      %s11 = ssub.s32 32, 32
      %12 = vsyncadd [#allocation3], %s11
      %s14 = sshll.u32 [#allocation2], 4
      %s15 = int_to_ptr.vmem [resolvable:$true] %s14
      %17 = dma.hbm_to_vmem [thread:$0]  %s0, 32, %s15, [#allocation3]
    $region5: #{tpu_custom_call.1} parent=1 // pred_fallthru
      _
    // Predicated region
    $region6: #{tpu_custom_call.1} parent=1 // pred_check
      _
    $region7: #{tpu_custom_call.1} parent=1 // pred_check_branch
      %19 = sbr.rel (0) target = $region9
    $region8: #{tpu_custom_call.1} parent=1 // pred_region
      %20 = dma.done [#allocation3], 32
    $region9: #{tpu_custom_call.1} parent=1 // pred_fallthru
      _
    %v21 = vld [vmem:[#allocation2] sm:$0x3]
    %22 = vst [vmem:[#allocation5] sm:$0x3] %v21
    // Predicated region
    $region10: #{tpu_custom_call.1} parent=1 // pred_check
      _
    $region11: #{tpu_custom_call.1} parent=1 // pred_check_branch
      %24 = sbr.rel (0) target = $region13
    $region12: #{tpu_custom_call.1} parent=1 // pred_region
      %s26 = ssub.s32 32, 32
      %27 = vsyncadd [#allocation4], %s26
      %s29 = sshll.u32 [#allocation5], 4
      %s30 = int_to_ptr.vmem [resolvable:$true] %s29
      %32 = dma.vmem_to_hbm [thread:$0]  %s30, 32, %s1, [#allocation4]
    $region13: #{tpu_custom_call.1} parent=1 // pred_fallthru
      _
    // Predicated region
    $region14: #{tpu_custom_call.1} parent=1 // pred_check
      _
    $region15: #{tpu_custom_call.1} parent=1 // pred_check_branch
      %34 = sbr.rel (0) target = $region17
    $region16: #{tpu_custom_call.1} parent=1 // pred_region
      %35 = dma.done [#allocation4], 32
    $region17: #{tpu_custom_call.1} parent=1 // pred_fallthru
      _
    %36 = vsyncpa [#allocation3], 1
    %37 = vsyncpa [#allocation4], 1

</llo_original>
